<compile_context>
chip_gen: v5e
topology: v5e:2x2
jax: 0.10.0
libtpu: 0.0.40
codegen_flags: <defaults>
</compile_context>

<pallas_src>
import jax
import jax.numpy as jnp
from jax.experimental import pallas as pl
from jax.experimental.pallas import tpu as pltpu

HIDDEN = 312            # fixed by the module definition
LANE = 128
SUBLANE = 8
TILE_B_MAX = 2048       # sized for the v7x 64 MiB VMEM / 32 MiB scoped default


def _round_up(n, m):
    return ((n + m - 1) // m) * m


def qnetwork_kernel(x_ref, w1_ref, b1_ref, w2_ref, b2_ref, out_ref):
    # fc1: bf16 x bf16 -> f32 accumulate on the MXU; bias-add + ReLU in f32 on the VPU.
    h = jnp.dot(x_ref[...], w1_ref[...], preferred_element_type=jnp.float32) + b1_ref[...]
    h = jnp.maximum(h, 0.0)
    # fc2: feed bf16 back to the MXU, keep f32 accumulation; store is lane-dense (128 wide).
    y = jnp.dot(h.astype(jnp.bfloat16), w2_ref[...],
                preferred_element_type=jnp.float32) + b2_ref[...]
    out_ref[...] = y


def prepare_params(w1, b1, w2, b2):
    """Zero-pad hidden 312->384 and out->multiple of 128; cast matmul weights to bf16.

    Padded hidden columns have zero weights+bias, so ReLU(0)=0 and they contribute nothing
    to fc2; padded output columns are zero and sliced off in the wrapper -> exact semantics.
    """
    in_f, hid = w1.shape
    assert w2.shape[0] == hid and b1.shape == (1, hid)
    out_f = w2.shape[1]
    h_pad = _round_up(hid, LANE)                 # 312 -> 384
    o_pad = _round_up(max(out_f, LANE), LANE)    # 8   -> 128

    w1p = jnp.zeros((in_f, h_pad), jnp.float32).at[:, :hid].set(w1).astype(jnp.bfloat16)
    b1p = jnp.zeros((1, h_pad), jnp.float32).at[:, :hid].set(b1)
    w2p = jnp.zeros((h_pad, o_pad), jnp.float32).at[:hid, :out_f].set(w2).astype(jnp.bfloat16)
    b2p = jnp.zeros((1, o_pad), jnp.float32).at[:, :out_f].set(b2)
    return (w1p, b1p, w2p, b2p), out_f


def qnetwork_forward(x, padded_params, out_features):
    w1p, b1p, w2p, b2p = padded_params
    B, in_f = x.shape
    h_pad = w1p.shape[1]
    o_pad = w2p.shape[1]

    tile_b = min(TILE_B_MAX, _round_up(B, SUBLANE))
    b_pad = _round_up(B, tile_b)
    num_tiles = b_pad // tile_b

    xb = x.astype(jnp.bfloat16)
    if b_pad != B:
        xb = jnp.zeros((b_pad, in_f), jnp.bfloat16).at[:B].set(xb)

    # Deeper input pipelining only pays once there are several grid steps.
    if num_tiles >= 3:
        x_spec = pl.BlockSpec((tile_b, in_f), lambda i: (i, 0),
                              pipeline_mode=pl.Buffered(3))
    else:
        x_spec = pl.BlockSpec((tile_b, in_f), lambda i: (i, 0))

    def resident(shape):
        return pl.BlockSpec(shape, lambda i: (0, 0))

    grid_spec = pltpu.PrefetchScalarGridSpec(
        num_scalar_prefetch=0,
        grid=(num_tiles,),
        in_specs=[x_spec,
                  resident((in_f, h_pad)),
                  resident((1, h_pad)),
                  resident((h_pad, o_pad)),
                  resident((1, o_pad))],
        out_specs=pl.BlockSpec((tile_b, o_pad), lambda i: (i, 0)),
    )

    cost = pl.CostEstimate(
        flops=2 * b_pad * (in_f * h_pad + h_pad * o_pad),
        transcendentals=0,
        bytes_accessed=(xb.size * 2 + w1p.size * 2 + w2p.size * 2
                        + b1p.size * 4 + b2p.size * 4 + b_pad * o_pad * 4),
    )

    out_padded = pl.pallas_call(
        qnetwork_kernel,
        out_shape=jax.ShapeDtypeStruct((b_pad, o_pad), jnp.float32),
        grid_spec=grid_spec,
        compiler_params=pltpu.CompilerParams(
            dimension_semantics=("parallel",),    # shards batch tiles across v7x's 2 TCs
            vmem_limit_bytes=32 * 1024 * 1024,    # lifts v5e's 16 MiB scoped default
        ),
        cost_estimate=cost,
    )(xb, w1p, b1p, w2p, b2p)

    return out_padded[:B, :out_features]


def init_params(key, input_size, hidden_size, output_size):
    # Deterministic synthetic init (PyTorch-style uniform ranges, not a checkpoint load).
    k1, k2, k3, k4 = jax.random.split(key, 4)
    bound1 = 1.0 / jnp.sqrt(input_size)
    bound2 = 1.0 / jnp.sqrt(hidden_size)
    w1 = jax.random.uniform(k1, (input_size, hidden_size), jnp.float32, -bound1, bound1)
    b1 = jax.random.uniform(k2, (1, hidden_size), jnp.float32, -bound1, bound1)
    w2 = jax.random.uniform(k3, (hidden_size, output_size), jnp.float32, -bound2, bound2)
    b2 = jax.random.uniform(k4, (1, output_size), jnp.float32, -bound2, bound2)
    return w1, b1, w2, b2


if __name__ == "__main__":
    input_size = 32
    output_size = 8
    batch = 2   # tiny demo batch; TODO(synk): in production, batch many env steps per call —
                # at B=2 wall-clock is launch/DMA overhead regardless of kernel tuning.

    key = jax.random.PRNGKey(0)
    kx, kp = jax.random.split(key)
    x = jax.random.normal(kx, (batch, input_size), jnp.float32)
    w1, b1, w2, b2 = init_params(kp, input_size, HIDDEN, output_size)

    padded_params, out_f = prepare_params(w1, b1, w2, b2)
    out = qnetwork_forward(x, padded_params, out_f)
    jax.block_until_ready(out)
    assert out.shape == (batch, output_size)

    # Reference that mirrors the kernel's bf16-in / f32-accumulate numerics.
    w1p, b1p, w2p, b2p = padded_params
    ref_h = jnp.maximum(
        jnp.dot(x.astype(jnp.bfloat16), w1p, preferred_element_type=jnp.float32) + b1p, 0.0)
    ref = (jnp.dot(ref_h.astype(jnp.bfloat16), w2p, preferred_element_type=jnp.float32)
           + b2p)[:, :output_size]
    assert jnp.allclose(out, ref, atol=2e-3, rtol=2e-2)

    # Sanity vs. the pure-f32 module semantics (bf16 weights cost ~0.5% relative error).
    ref_f32 = jnp.maximum(x @ w1 + b1, 0.0) @ w2 + b2
    assert jnp.allclose(out, ref_f32, atol=5e-2, rtol=5e-2)

    print("KERNEL_OK")
</pallas_src>

<mosaic_0001>
module attributes {stable_mosaic.version = 11 : i64} {
  func.func @qnetwork_kernel(%arg0: i32, %arg1: memref<8x32xbf16, #tpu.memory_space<vmem>>, %arg2: memref<32x384xbf16, #tpu.memory_space<vmem>>, %arg3: memref<1x384xf32, #tpu.memory_space<vmem>>, %arg4: memref<384x128xbf16, #tpu.memory_space<vmem>>, %arg5: memref<1x128xf32, #tpu.memory_space<vmem>>, %arg6: memref<8x128xf32, #tpu.memory_space<vmem>>) attributes {dimension_semantics = [#tpu.dimension_semantics<parallel>], iteration_bounds = array<i64: 1>, scalar_prefetch = 0 : i64, scratch_operands = 0 : i64, tpu.core_type = #tpu.core_type<tc>, window_params = [{transform_indices = @transform_0, window_bounds = array<i64: 8, 32>}, {pipeline_mode = #tpu.pipeline_mode<synchronous>, transform_indices = @transform_1, window_bounds = array<i64: 32, 384>}, {pipeline_mode = #tpu.pipeline_mode<synchronous>, transform_indices = @transform_2, window_bounds = array<i64: 1, 384>}, {pipeline_mode = #tpu.pipeline_mode<synchronous>, transform_indices = @transform_3, window_bounds = array<i64: 384, 128>}, {pipeline_mode = #tpu.pipeline_mode<synchronous>, transform_indices = @transform_4, window_bounds = array<i64: 1, 128>}, {transform_indices = @transform_5, window_bounds = array<i64: 8, 128>}]} {
    %c0 = arith.constant 0 : index
    %c0_0 = arith.constant 0 : index
    %0 = vector.load %arg1[%c0, %c0_0] : memref<8x32xbf16, #tpu.memory_space<vmem>>, vector<8x32xbf16>
    %c0_1 = arith.constant 0 : index
    %c0_2 = arith.constant 0 : index
    %1 = vector.load %arg2[%c0_1, %c0_2] : memref<32x384xbf16, #tpu.memory_space<vmem>>, vector<32x384xbf16>
    %cst = arith.constant dense<0.000000e+00> : vector<8x384xf32>
    %2 = tpu.matmul %0, %1, %cst {dimension_numbers = #tpu.dot_dimension_numbers<[1], [0], [0], [1], [0, 0, 1, 1], [], []>} : vector<8x32xbf16>, vector<32x384xbf16>, vector<8x384xf32> -> vector<8x384xf32>
    %c0_3 = arith.constant 0 : index
    %c0_4 = arith.constant 0 : index
    %3 = vector.load %arg3[%c0_3, %c0_4] : memref<1x384xf32, #tpu.memory_space<vmem>>, vector<1x384xf32>
    %4 = vector.broadcast %3 : vector<1x384xf32> to vector<8x384xf32>
    %5 = arith.addf %2, %4 : vector<8x384xf32>
    %cst_5 = arith.constant 0.000000e+00 : f32
    %6 = vector.broadcast %cst_5 : f32 to vector<8x384xf32>
    %7 = arith.maximumf %5, %6 : vector<8x384xf32>
    %8 = arith.truncf %7 : vector<8x384xf32> to vector<8x384xbf16>
    %c0_6 = arith.constant 0 : index
    %c0_7 = arith.constant 0 : index
    %9 = vector.load %arg4[%c0_6, %c0_7] : memref<384x128xbf16, #tpu.memory_space<vmem>>, vector<384x128xbf16>
    %cst_8 = arith.constant dense<0.000000e+00> : vector<8x128xf32>
    %10 = tpu.matmul %8, %9, %cst_8 {dimension_numbers = #tpu.dot_dimension_numbers<[1], [0], [0], [1], [0, 0, 1, 1], [], []>} : vector<8x384xbf16>, vector<384x128xbf16>, vector<8x128xf32> -> vector<8x128xf32>
    %c0_9 = arith.constant 0 : index
    %c0_10 = arith.constant 0 : index
    %11 = vector.load %arg5[%c0_9, %c0_10] : memref<1x128xf32, #tpu.memory_space<vmem>>, vector<1x128xf32>
    %12 = vector.broadcast %11 : vector<1x128xf32> to vector<8x128xf32>
    %13 = arith.addf %10, %12 : vector<8x128xf32>
    %c0_11 = arith.constant 0 : index
    %c0_12 = arith.constant 0 : index
    %14 = vector.load %arg6[%c0_11, %c0_12] : memref<8x128xf32, #tpu.memory_space<vmem>>, vector<8x128xf32>
    tpu.vector_store %arg6[%c0_11, %c0_12], %13 {strides = array<i32>} : memref<8x128xf32, #tpu.memory_space<vmem>>, vector<8x128xf32>,
    return
  }
  func.func @transform_0(%arg0: i32) -> (i32, i32) {
    %c0_i32 = arith.constant 0 : i32
    %c0_i32_0 = arith.constant 0 : i32
    return %arg0, %c0_i32 : i32, i32
  }
  func.func @transform_1(%arg0: i32) -> (i32, i32) {
    %c0_i32 = arith.constant 0 : i32
    %c0_i32_0 = arith.constant 0 : i32
    %c0_i32_1 = arith.constant 0 : i32
    return %c0_i32, %c0_i32_0 : i32, i32
  }
  func.func @transform_2(%arg0: i32) -> (i32, i32) {
    %c0_i32 = arith.constant 0 : i32
    %c0_i32_0 = arith.constant 0 : i32
    %c0_i32_1 = arith.constant 0 : i32
    return %c0_i32, %c0_i32_0 : i32, i32
  }
  func.func @transform_3(%arg0: i32) -> (i32, i32) {
    %c0_i32 = arith.constant 0 : i32
    %c0_i32_0 = arith.constant 0 : i32
    %c0_i32_1 = arith.constant 0 : i32
    return %c0_i32, %c0_i32_0 : i32, i32
  }
  func.func @transform_4(%arg0: i32) -> (i32, i32) {
    %c0_i32 = arith.constant 0 : i32
    %c0_i32_0 = arith.constant 0 : i32
    %c0_i32_1 = arith.constant 0 : i32
    return %c0_i32, %c0_i32_0 : i32, i32
  }
  func.func @transform_5(%arg0: i32) -> (i32, i32) {
    %c0_i32 = arith.constant 0 : i32
    %c0_i32_0 = arith.constant 0 : i32
    return %arg0, %c0_i32 : i32, i32
  }
}

</mosaic_0001>

<llo_original>
// kernel: tpu_custom_call.1
$region0: #{tpu_custom_call.1}
  #allocation0 [shape = 'u32[]', space=smem, size = 0x4, offset = 0x4, fixed_abs, tag = 'smem constant byte address 0x4 - core index']
  #allocation1 [shape = 'u32[72,128]{1,0:T(1,128)}', space=vmem, size = 0x9000, scoped, tag = 'internal scratch']
  %s0 = inlined_call_operand.hbm [shape: bf16[8,32], index: 0, kind: input, shape index: {}]
  %s1 = inlined_call_operand.hbm [shape: bf16[32,384], index: 1, kind: input, shape index: {}]
  %s2 = inlined_call_operand.hbm [shape: f32[1,384], index: 2, kind: input, shape index: {}]
  %s3 = inlined_call_operand.hbm [shape: bf16[384,128], index: 3, kind: input, shape index: {}]
  %s4 = inlined_call_operand.vmem [shape: f32[1,128], index: 4, kind: input, shape index: {}]
  %s5 = inlined_call_operand.hbm [shape: f32[8,128], index: 5, kind: output, shape index: {}]
  %s6 = sld [smem:[#allocation0]]
  $region46: #{tpu_custom_call.1} parent=0
    _
  %s8 = ssub.s32 1, %s6
  %s9 = scalar_select 0, %s8, %s6
  $region1: #{tpu_custom_call.1} parent=0
    #allocation2 [shape = 'u8[2048]{0}', space=vmem, size = 0x800, scoped, tag = 'input window, operand 0, single buffered']
    #allocation3 [shape = 's32[1]{0}', space=sflag, size = 0x4, scoped, tag = 'scoped memory for tpu_custom_call.1']
    #allocation4 [shape = 's32[1]{0}', space=sflag, size = 0x4, scoped, tag = 'scoped memory for tpu_custom_call.1']
    #allocation5 [shape = 'u8[24576]{0}', space=vmem, size = 0x6000, scoped, tag = 'input window, operand 1, single buffered']
    #allocation6 [shape = 's32[1]{0}', space=sflag, size = 0x4, scoped, tag = 'scoped memory for tpu_custom_call.1']
    #allocation7 [shape = 'u8[1536]{0}', space=vmem, size = 0x800, scoped, tag = 'input window, operand 2, single buffered']
    #allocation8 [shape = 'u8[98304]{0}', space=vmem, size = 0x18000, scoped, tag = 'input window, operand 3, single buffered']
    #allocation9 [shape = 's32[1]{0}', space=sflag, size = 0x4, scoped, tag = 'scoped memory for tpu_custom_call.1']
    #allocation10 [shape = 'u8[4096]{0}', space=vmem, size = 0x1000, scoped, tag = 'output window, operand 0, single buffered']
    %10 = vsyncpa [#allocation3], 0
    %11 = vsyncpa [#allocation6], 0
    %12 = vsyncpa [#allocation9], 0
    %13 = vsyncpa [#allocation4], 0
    // Predicated region
    $region2: #{tpu_custom_call.1} parent=1 // pred_check
      _
    $region3: #{tpu_custom_call.1} parent=1 // pred_check_branch
      %15 = sbr.rel (0) target = $region5
    $region4: #{tpu_custom_call.1} parent=1 // pred_region
      %17 = vsyncadd [#allocation3], 0
      %s19 = sshll.u32 %s0, 4
      %s20 = int_to_ptr.hbm [resolvable:$true] %s19
      %s21 = sshll.u32 [#allocation2], 4
      %s22 = int_to_ptr.vmem [resolvable:$true] %s21
      %24 = dma.hbm_to_vmem [thread:$0]  %s20, 64, %s22, [#allocation3]
    $region5: #{tpu_custom_call.1} parent=1 // pred_fallthru
      _
    // Predicated region
    $region6: #{tpu_custom_call.1} parent=1 // pred_check
      _
    $region7: #{tpu_custom_call.1} parent=1 // pred_check_branch
      %26 = sbr.rel (0) target = $region9
    $region8: #{tpu_custom_call.1} parent=1 // pred_region
      %28 = vsyncadd [#allocation6], 0
      %s29 = sshll.u32 %s1, 4
      %s30 = int_to_ptr.hbm [resolvable:$true] %s29
      %s31 = sshll.u32 [#allocation5], 4
      %s32 = int_to_ptr.vmem [resolvable:$true] %s31
      %37 = dma.hbm_to_vmem [thread:$0]  %s30, 768, %s32, [#allocation6], 192, 192, 12
    $region9: #{tpu_custom_call.1} parent=1 // pred_fallthru
      _
    // Predicated region
    $region10: #{tpu_custom_call.1} parent=1 // pred_check
      _
    $region11: #{tpu_custom_call.1} parent=1 // pred_check_branch
      %39 = sbr.rel (0) target = $region13
    $region12: #{tpu_custom_call.1} parent=1 // pred_region
      %41 = vsyncadd [#allocation6], 0
      %s43 = sshll.u32 %s2, 4
      %s44 = int_to_ptr.hbm [resolvable:$true] %s43
      %s45 = sshll.u32 [#allocation7], 4
      %s46 = int_to_ptr.vmem [resolvable:$true] %s45
      %48 = dma.hbm_to_vmem [thread:$0]  %s44, 48, %s46, [#allocation6]
    $region13: #{tpu_custom_call.1} parent=1 // pred_fallthru
      _
    // Predicated region
    $region14: #{tpu_custom_call.1} parent=1 // pred_check
      _
    $region15: #{tpu_custom_call.1} parent=1 // pred_check_branch
      %50 = sbr.rel (0) target = $region17
    $region16: #{tpu_custom_call.1} parent=1 // pred_region
      %52 = vsyncadd [#allocation9], 0
      %s53 = sshll.u32 %s3, 4
      %s54 = int_to_ptr.hbm [resolvable:$true] %s53
      %s55 = sshll.u32 [#allocation8], 4
      %s56 = int_to_ptr.vmem [resolvable:$true] %s55
      %61 = dma.hbm_to_vmem [thread:$0]  %s54, 3072, %s56, [#allocation9], 64, 64, 4
    $region17: #{tpu_custom_call.1} parent=1 // pred_fallthru
      _
    // Predicated region
    $region18: #{tpu_custom_call.1} parent=1 // pred_check
      _
    $region19: #{tpu_custom_call.1} parent=1 // pred_check_branch
      %63 = sbr.rel (0) target = $region21
    $region20: #{tpu_custom_call.1} parent=1 // pred_region
      _
    $region21: #{tpu_custom_call.1} parent=1 // pred_fallthru
      _
    // Predicated region
    $region22: #{tpu_custom_call.1} parent=1 // pred_check
      _
    $region23: #{tpu_custom_call.1} parent=1 // pred_check_branch
      %65 = sbr.rel (0) target = $region25
    $region24: #{tpu_custom_call.1} parent=1 // pred_region
      %67 = dma.done [#allocation3], 64
    $region25: #{tpu_custom_call.1} parent=1 // pred_fallthru
      _
    // Predicated region
    $region26: #{tpu_custom_call.1} parent=1 // pred_check
      _
    $region27: #{tpu_custom_call.1} parent=1 // pred_check_branch
      %69 = sbr.rel (0) target = $region29
    $region28: #{tpu_custom_call.1} parent=1 // pred_region
      %71 = dma.done [#allocation6], 768
    $region29: #{tpu_custom_call.1} parent=1 // pred_fallthru
      _
    // Predicated region
    $region30: #{tpu_custom_call.1} parent=1 // pred_check
      _
    $region31: #{tpu_custom_call.1} parent=1 // pred_check_branch
      %73 = sbr.rel (0) target = $region33
    $region32: #{tpu_custom_call.1} parent=1 // pred_region
      %75 = dma.done [#allocation6], 48
    $region33: #{tpu_custom_call.1} parent=1 // pred_fallthru
      _
    // Predicated region
    $region34: #{tpu_custom_call.1} parent=1 // pred_check
      _
    $region35: #{tpu_custom_call.1} parent=1 // pred_check_branch
      %77 = sbr.rel (0) target = $region37
    $region36: #{tpu_custom_call.1} parent=1 // pred_region
      %79 = dma.done [#allocation9], 3072
    $region37: #{tpu_custom_call.1} parent=1 // pred_fallthru
      _
    %v81 = vld [vmem:[#allocation2] sm:$0xf]
    %v82 = vld [vmem:[#allocation5] sm:$0xff]
    %v83 = vld [vmem:[#allocation5 + $0x8] sm:$0xf]
    %v84 = vld [vmem:[#allocation5 + $0xc] sm:$0xff]
    %v85 = vld [vmem:[#allocation5 + $0x14] sm:$0xf]
    %v86 = vld [vmem:[#allocation5 + $0x18] sm:$0xff]
    %v87 = vld [vmem:[#allocation5 + $0x20] sm:$0xf]
    %v88 = vld [vmem:[#allocation5 + $0x24] sm:$0xff]
    %v89 = vld [vmem:[#allocation5 + $0x2c] sm:$0xf]
    %v90 = vld [vmem:[#allocation7] sm:$0x7]
    %v92 = vperm.slane %v90, 0
    %v93 = vperm.slane %v90, 1
    %v94 = vperm.slane %v90, 2
    %v106 = vunpack.c.l.b16 %v82
    %v107 = vunpack.c.h.b16 %v82
    %v108 = vunpack.c.l.b16 %v83
    %v109 = vunpack.c.l.b16 %v84
    %v110 = vunpack.c.h.b16 %v84
    %v111 = vunpack.c.l.b16 %v85
    %v112 = vunpack.c.l.b16 %v86
    %v113 = vunpack.c.h.b16 %v86
    %v114 = vunpack.c.l.b16 %v87
    %v115 = vunpack.c.l.b16 %v88
    %v116 = vunpack.c.h.b16 %v88
    %v117 = vunpack.c.l.b16 %v89
    %v118 = vpack.c.b16 %v109, %v106
    %v119 = vpack.c.b16 %v110, %v107
    %v120 = vpack.c.b16 %v111, %v108
    %v121 = vpack.c.b16 %v115, %v112
    %v122 = vpack.c.b16 %v116, %v113
    %v123 = vpack.c.b16 %v117, %v114
    %vm130 = vcmask 261120
    %v132 = vsel %vm130, %v81, 0
    %134 = vmatpush.bf16.msra.mxu0 0
    %135 = vmatpush.bf16.msra.mxu0 0
    %136 = vmatpush.bf16.msra.mxu0 0
    %137 = vmatpush.bf16.msra.mxu0 0
    %138 = vmatpush.bf16.msra.mxu0 0
    %139 = vmatpush.bf16.msra.mxu0 0
    %140 = vmatpush.bf16.msra.mxu0 %v121
    %141 = vmatpush.bf16.msra.mxu0 %v118
    %142 = vmatmul.bf16.gmra.mxu0 %v132
    %v143 = vpop.f32.mrf.mxu0
    %v144 = vadd.f32 %v92, %v143
    %v145 = vpop.f32.mrf.mxu0
    %146 = vdwg.mxu0
    %147 = vmatpush.bf16.msra.mxu0 0
    %148 = vmatpush.bf16.msra.mxu0 0
    %149 = vmatpush.bf16.msra.mxu0 0
    %150 = vmatpush.bf16.msra.mxu0 0
    %151 = vmatpush.bf16.msra.mxu0 0
    %152 = vmatpush.bf16.msra.mxu0 0
    %153 = vmatpush.bf16.msra.mxu0 %v122
    %154 = vmatpush.bf16.msra.mxu0 %v119
    %155 = vmatmul.bf16.gmra.mxu0 %v132
    %v156 = vpop.f32.mrf.mxu0
    %v157 = vadd.f32 %v93, %v156
    %v158 = vpop.f32.mrf.mxu0
    %159 = vdwg.mxu0
    %160 = vmatpush.bf16.msra.mxu0 0
    %161 = vmatpush.bf16.msra.mxu0 0
    %162 = vmatpush.bf16.msra.mxu0 0
    %163 = vmatpush.bf16.msra.mxu0 0
    %164 = vmatpush.bf16.msra.mxu0 0
    %165 = vmatpush.bf16.msra.mxu0 0
    %166 = vmatpush.bf16.msra.mxu0 %v123
    %167 = vmatpush.bf16.msra.mxu0 %v120
    %168 = vmatmul.bf16.gmra.mxu0 %v132
    %v169 = vpop.f32.mrf.mxu0
    %v170 = vadd.f32 %v94, %v169
    %v171 = vpop.f32.mrf.mxu0
    %172 = vdwg.mxu0
    %v173 = vmax.f32 %v144, 0.0
    %v174 = vmax.f32 %v157, 0.0
    %v175 = vmax.f32 %v170, 0.0
    %v176 = vpack.c.bf16 %v173, %v173
    %v177 = vpack.c.bf16 %v174, %v174
    %v178 = vpack.c.bf16 %v175, %v175
    %v179 = vld [vmem:[#allocation8] sm:$0xf]
    %v180 = vld [vmem:[#allocation8 + $0x4] sm:$0xf]
    %v181 = vld [vmem:[#allocation8 + $0x8] sm:$0xf]
    %v182 = vld [vmem:[#allocation8 + $0xc] sm:$0xf]
    %v183 = vld [vmem:[#allocation8 + $0x10] sm:$0xf]
    %v184 = vld [vmem:[#allocation8 + $0x14] sm:$0xf]
    %v185 = vld [vmem:[#allocation8 + $0x18] sm:$0xf]
    %v186 = vld [vmem:[#allocation8 + $0x1c] sm:$0xf]
    %v187 = vld [vmem:[#allocation8 + $0x20] sm:$0xf]
    %v188 = vld [vmem:[#allocation8 + $0x24] sm:$0xf]
    %v189 = vld [vmem:[#allocation8 + $0x28] sm:$0xf]
    %v190 = vld [vmem:[#allocation8 + $0x2c] sm:$0xf]
    %v191 = vld [vmem:[#allocation8 + $0x30] sm:$0xf]
    %v192 = vld [vmem:[#allocation8 + $0x34] sm:$0xf]
    %v193 = vld [vmem:[#allocation8 + $0x38] sm:$0xf]
    %v194 = vld [vmem:[#allocation8 + $0x3c] sm:$0xf]
    %v195 = vld [vmem:[#allocation8 + $0x40] sm:$0xf]
    %v196 = vld [vmem:[#allocation8 + $0x44] sm:$0xf]
    %v197 = vld [vmem:[#allocation8 + $0x48] sm:$0xf]
    %v198 = vld [vmem:[#allocation8 + $0x4c] sm:$0xf]
    %v199 = vld [vmem:[#allocation8 + $0x50] sm:$0xf]
    %v200 = vld [vmem:[#allocation8 + $0x54] sm:$0xf]
    %v201 = vld [vmem:[#allocation8 + $0x58] sm:$0xf]
    %v202 = vld [vmem:[#allocation8 + $0x5c] sm:$0xf]
    %v203 = vld [vmem:[#allocation8 + $0x60] sm:$0xf]
    %v204 = vld [vmem:[#allocation8 + $0x64] sm:$0xf]
    %v205 = vld [vmem:[#allocation8 + $0x68] sm:$0xf]
    %v206 = vld [vmem:[#allocation8 + $0x6c] sm:$0xf]
    %v207 = vld [vmem:[#allocation8 + $0x70] sm:$0xf]
    %v208 = vld [vmem:[#allocation8 + $0x74] sm:$0xf]
    %v209 = vld [vmem:[#allocation8 + $0x78] sm:$0xf]
    %v210 = vld [vmem:[#allocation8 + $0x7c] sm:$0xf]
    %v211 = vld [vmem:[#allocation8 + $0x80] sm:$0xf]
    %v212 = vld [vmem:[#allocation8 + $0x84] sm:$0xf]
    %v213 = vld [vmem:[#allocation8 + $0x88] sm:$0xf]
    %v214 = vld [vmem:[#allocation8 + $0x8c] sm:$0xf]
    %v215 = vld [vmem:[#allocation8 + $0x90] sm:$0xf]
    %v216 = vld [vmem:[#allocation8 + $0x94] sm:$0xf]
    %v217 = vld [vmem:[#allocation8 + $0x98] sm:$0xf]
    %v218 = vld [vmem:[#allocation8 + $0x9c] sm:$0xf]
    %v219 = vld [vmem:[#allocation8 + $0xa0] sm:$0xf]
    %v220 = vld [vmem:[#allocation8 + $0xa4] sm:$0xf]
    %v221 = vld [vmem:[#allocation8 + $0xa8] sm:$0xf]
    %v222 = vld [vmem:[#allocation8 + $0xac] sm:$0xf]
    %v223 = vld [vmem:[#allocation8 + $0xb0] sm:$0xf]
    %v224 = vld [vmem:[#allocation8 + $0xb4] sm:$0xf]
    %v225 = vld [vmem:[#allocation8 + $0xb8] sm:$0xf]
    %v226 = vld [vmem:[#allocation8 + $0xbc] sm:$0xf]
    %v227 = vld [vmem:[%s4] sm:$0x1]
    %v229 = vperm.slane %v227, 0
    %v279 = vunpack.c.l.b16 %v179
    %v280 = vunpack.c.l.b16 %v180
    %v281 = vunpack.c.l.b16 %v181
    %v282 = vunpack.c.l.b16 %v182
    %v283 = vunpack.c.l.b16 %v183
    %v284 = vunpack.c.l.b16 %v184
    %v285 = vunpack.c.l.b16 %v185
    %v286 = vunpack.c.l.b16 %v186
    %v287 = vunpack.c.l.b16 %v187
    %v288 = vunpack.c.l.b16 %v188
    %v289 = vunpack.c.l.b16 %v189
    %v290 = vunpack.c.l.b16 %v190
    %v291 = vunpack.c.l.b16 %v191
    %v292 = vunpack.c.l.b16 %v192
    %v293 = vunpack.c.l.b16 %v193
    %v294 = vunpack.c.l.b16 %v194
    %v295 = vunpack.c.l.b16 %v195
    %v296 = vunpack.c.l.b16 %v196
    %v297 = vunpack.c.l.b16 %v197
    %v298 = vunpack.c.l.b16 %v198
    %v299 = vunpack.c.l.b16 %v199
    %v300 = vunpack.c.l.b16 %v200
    %v301 = vunpack.c.l.b16 %v201
    %v302 = vunpack.c.l.b16 %v202
    %v303 = vunpack.c.l.b16 %v203
    %v304 = vunpack.c.l.b16 %v204
    %v305 = vunpack.c.l.b16 %v205
    %v306 = vunpack.c.l.b16 %v206
    %v307 = vunpack.c.l.b16 %v207
    %v308 = vunpack.c.l.b16 %v208
    %v309 = vunpack.c.l.b16 %v209
    %v310 = vunpack.c.l.b16 %v210
    %v311 = vunpack.c.l.b16 %v211
    %v312 = vunpack.c.l.b16 %v212
    %v313 = vunpack.c.l.b16 %v213
    %v314 = vunpack.c.l.b16 %v214
    %v315 = vunpack.c.l.b16 %v215
    %v316 = vunpack.c.l.b16 %v216
    %v317 = vunpack.c.l.b16 %v217
    %v318 = vunpack.c.l.b16 %v218
    %v319 = vunpack.c.l.b16 %v219
    %v320 = vunpack.c.l.b16 %v220
    %v321 = vunpack.c.l.b16 %v221
    %v322 = vunpack.c.l.b16 %v222
    %v323 = vunpack.c.l.b16 %v223
    %v324 = vunpack.c.l.b16 %v224
    %v325 = vunpack.c.l.b16 %v225
    %v326 = vunpack.c.l.b16 %v226
    %v327 = vpack.c.b16 %v280, %v279
    %v328 = vpack.c.b16 %v282, %v281
    %v329 = vpack.c.b16 %v284, %v283
    %v330 = vpack.c.b16 %v286, %v285
    %v331 = vpack.c.b16 %v288, %v287
    %v332 = vpack.c.b16 %v290, %v289
    %v333 = vpack.c.b16 %v292, %v291
    %v334 = vpack.c.b16 %v294, %v293
    %v335 = vpack.c.b16 %v296, %v295
    %v336 = vpack.c.b16 %v298, %v297
    %v337 = vpack.c.b16 %v300, %v299
    %v338 = vpack.c.b16 %v302, %v301
    %v339 = vpack.c.b16 %v304, %v303
    %v340 = vpack.c.b16 %v306, %v305
    %v341 = vpack.c.b16 %v308, %v307
    %v342 = vpack.c.b16 %v310, %v309
    %v343 = vpack.c.b16 %v312, %v311
    %v344 = vpack.c.b16 %v314, %v313
    %v345 = vpack.c.b16 %v316, %v315
    %v346 = vpack.c.b16 %v318, %v317
    %v347 = vpack.c.b16 %v320, %v319
    %v348 = vpack.c.b16 %v322, %v321
    %v349 = vpack.c.b16 %v324, %v323
    %v350 = vpack.c.b16 %v326, %v325
    %375 = vmatpush.bf16.msra.mxu0 %v334
    %376 = vmatpush.bf16.msra.mxu0 %v333
    %377 = vmatpush.bf16.msra.mxu0 %v332
    %378 = vmatpush.bf16.msra.mxu0 %v331
    %379 = vmatpush.bf16.msra.mxu0 %v330
    %380 = vmatpush.bf16.msra.mxu0 %v329
    %381 = vmatpush.bf16.msra.mxu0 %v328
    %382 = vmatpush.bf16.msra.mxu0 %v327
    %383 = vmatmul.bf16.gmra.mxu0 %v176
    %v384 = vpop.f32.mrf.mxu0
    %v385 = vadd.f32 %v229, %v384
    %v386 = vpop.f32.mrf.mxu0
    %387 = vdwg.mxu0
    %388 = vmatpush.bf16.msra.mxu0 %v342
    %389 = vmatpush.bf16.msra.mxu0 %v341
    %390 = vmatpush.bf16.msra.mxu0 %v340
    %391 = vmatpush.bf16.msra.mxu0 %v339
    %392 = vmatpush.bf16.msra.mxu0 %v338
    %393 = vmatpush.bf16.msra.mxu0 %v337
    %394 = vmatpush.bf16.msra.mxu0 %v336
    %395 = vmatpush.bf16.msra.mxu0 %v335
    %396 = vmatmul.bf16.gmra.mxu0 %v177
    %v397 = vpop.f32.mrf.mxu0
    %v398 = vadd.f32 %v385, %v397
    %v399 = vpop.f32.mrf.mxu0
    %400 = vdwg.mxu0
    %401 = vmatpush.bf16.msra.mxu0 %v350
    %402 = vmatpush.bf16.msra.mxu0 %v349
    %403 = vmatpush.bf16.msra.mxu0 %v348
    %404 = vmatpush.bf16.msra.mxu0 %v347
    %405 = vmatpush.bf16.msra.mxu0 %v346
    %406 = vmatpush.bf16.msra.mxu0 %v345
    %407 = vmatpush.bf16.msra.mxu0 %v344
    %408 = vmatpush.bf16.msra.mxu0 %v343
    %409 = vmatmul.bf16.gmra.mxu0 %v178
    %v410 = vpop.f32.mrf.mxu0
    %v411 = vadd.f32 %v398, %v410
    %v412 = vpop.f32.mrf.mxu0
    %413 = vdwg.mxu0
    %414 = vst [vmem:[#allocation10] sm:$0xff] %v411
    // Predicated region
    $region38: #{tpu_custom_call.1} parent=1 // pred_check
      _
    $region39: #{tpu_custom_call.1} parent=1 // pred_check_branch
      %416 = sbr.rel (0) target = $region41
    $region40: #{tpu_custom_call.1} parent=1 // pred_region
      %418 = vsyncadd [#allocation4], 0
      %s420 = sshll.u32 [#allocation10], 4
      %s421 = int_to_ptr.vmem [resolvable:$true] %s420
      %s422 = sshll.u32 %s5, 4
      %s423 = int_to_ptr.hbm [resolvable:$true] %s422
      %425 = dma.vmem_to_hbm [thread:$0]  %s421, 128, %s423, [#allocation4]
    $region41: #{tpu_custom_call.1} parent=1 // pred_fallthru
      _
    // Predicated region
    $region42: #{tpu_custom_call.1} parent=1 // pred_check
      _
    $region43: #{tpu_custom_call.1} parent=1 // pred_check_branch
      %427 = sbr.rel (0) target = $region45
    $region44: #{tpu_custom_call.1} parent=1 // pred_region
      %429 = dma.done [#allocation4], 128
    $region45: #{tpu_custom_call.1} parent=1 // pred_fallthru
      _
    %430 = vsyncpa [#allocation3], 1
    %431 = vsyncpa [#allocation6], 1
    %432 = vsyncpa [#allocation9], 1
    %433 = vsyncpa [#allocation4], 1

</llo_original>
